<compile_context>
chip_gen: v7x
topology: tpu7x:2x2x1
jax: 0.10.0
libtpu: 0.0.40
codegen_flags: <defaults>
</compile_context>

<pallas_src>
import functools
import math

import jax
import jax.numpy as jnp
from jax import lax
from jax.experimental import pallas as pl
from jax.experimental.pallas import tpu as pltpu

_LANE = 128
_VMEM_BUDGET = 40 * 1024 * 1024  # per-kernel tile budget; fits v7x 64 MiB VMEM


def _round_up(x, m):
    return ((x + m - 1) // m) * m


def _noisy_linear_kernel(x_ref, uw_ref, sw_ref, beff_ref, fin_ref, fout_ref,
                         o_ref, acc_ref, *, mxu_dtype):
    """One (batch_tile, out_tile) output block, accumulated over K tiles.

    acc += x_k @ u_w_k.T + ((x_k * f_in_k) @ sigma_w_k.T) * f_out
    out  = acc + b_eff              (at the last K step)
    """
    k = pl.program_id(2)

    @pl.when(k == 0)
    def _():
        acc_ref[...] = jnp.zeros_like(acc_ref)

    x = x_ref[...]                              # (tb, tk)  f32
    fin = fin_ref[...]                          # (1,  tk)  f32
    fout = fout_ref[...]                        # (1,  tO)  f32

    x_m = x.astype(mxu_dtype)                   # MXU operands (bf16 default)
    xs_m = (x * fin).astype(mxu_dtype)          # (tb, tk)

    # x @ W.T via dot_general contracting the feature axes; Mosaic feeds the
    # (tO, tk) weight slab to the MXU without an XLU transpose (same pattern
    # as the flash-attention q @ k.T contraction).
    contract = (((1,), (1,)), ((), ()))
    mean = lax.dot_general(x_m, uw_ref[...], contract,
                           preferred_element_type=jnp.float32)     # (tb, tO)
    noise = lax.dot_general(xs_m, sw_ref[...], contract,
                            preferred_element_type=jnp.float32)    # (tb, tO)

    acc_ref[...] += mean + noise * fout

    @pl.when(k == pl.num_programs(2) - 1)
    def _():
        o_ref[...] = (acc_ref[...] + beff_ref[...]).astype(o_ref.dtype)


def _select_tiles(B, I, O, x_item, w_item, batch_tile, out_tile):
    """Pick (tb, to, tk) under the VMEM budget.

    Priority: keep tb (intensity lever) and to >= 128 (lane-dense stores);
    shrink `to` first, then tile K, then shrink tb.
    """
    sub = 16 if w_item < 4 else 8               # bf16 packs 16 sublanes/vreg
    tb = min(_round_up(batch_tile, sub), _round_up(B, sub))
    to = min(_round_up(out_tile, _LANE), _round_up(O, _LANE))

    def footprint(tb_, to_, tk_):
        per_step = (tb_ * tk_ * x_item          # x tile (f32 in VMEM)
                    + 2 * to_ * tk_ * w_item    # u_w + sigma_w slabs
                    + tk_ * 4                   # f(eps_in) row
                    + 2 * to_ * 4               # f(eps_out) row + b_eff row
                    + tb_ * to_ * x_item)       # output tile
        return 2 * per_step + tb_ * to_ * 4     # double-buffer + f32 acc

    tk = I                                      # untiled K: weights resident
    while footprint(tb, to, tk) > _VMEM_BUDGET and to > _LANE:
        to -= _LANE
    if footprint(tb, to, tk) > _VMEM_BUDGET and I > _LANE:
        tk = _round_up(I, _LANE)
        while footprint(tb, to, tk) > _VMEM_BUDGET and tk > _LANE:
            tk = _LANE * max(1, (tk // _LANE) // 2)
    while footprint(tb, to, tk) > _VMEM_BUDGET and tb > sub:
        tb = max(sub, _round_up(tb // 2, sub))
    return tb, to, tk, footprint(tb, to, tk)


def factorized_noisy_forward(x, u_w, sigma_w, u_b, sigma_b, noise_key,
                             *, batch_tile=256, out_tile=256,
                             mxu_dtype=jnp.bfloat16):
    """Forward pass of FactorizedNoisy.

    x:        (B, in_features) float32
    u_w:      (out_features, in_features)
    sigma_w:  (out_features, in_features)
    u_b:      (out_features,)
    sigma_b:  (out_features,)
    mxu_dtype: dtype fed to the MXU.  Default bf16 (f32 accumulation); pass
               jnp.float32 for bit-tight accuracy (slower, 2x weight traffic).
    """
    B, in_features = x.shape
    out_features = u_w.shape[0]
    x_item = 4
    w_item = jnp.dtype(mxu_dtype).itemsize

    def f(v):
        return jnp.sign(v) * jnp.sqrt(jnp.abs(v))

    # --- glue: factorized noise, same sampling scheme as the PyTorch module.
    k_in, k_out = jax.random.split(noise_key)
    rand_in = f(jax.random.normal(k_in, (1, in_features), jnp.float32))    # (1, I)
    rand_out = f(jax.random.normal(k_out, (out_features, 1), jnp.float32)) # (O, 1)
    fout_row = rand_out.reshape(1, out_features)                           # lane-dense
    b_eff = (u_b + sigma_b * rand_out[:, 0]).reshape(1, out_features)      # (1, O)

    # --- tile selection + padding (128-aligned out axis, dtype-aware sublanes)
    tb, to, tk, fp = _select_tiles(B, in_features, out_features,
                                   x_item, w_item, batch_tile, out_tile)
    b_pad = _round_up(B, tb)
    o_pad = _round_up(out_features, to)
    i_pad = in_features if tk == in_features else _round_up(in_features, tk)

    if b_pad != B or i_pad != in_features:
        x = jnp.pad(x, ((0, b_pad - B), (0, i_pad - in_features)))
    if i_pad != in_features:
        pi = i_pad - in_features
        u_w = jnp.pad(u_w, ((0, 0), (0, pi)))
        sigma_w = jnp.pad(sigma_w, ((0, 0), (0, pi)))
        rand_in = jnp.pad(rand_in, ((0, 0), (0, pi)))
    if o_pad != out_features:
        po = o_pad - out_features
        u_w = jnp.pad(u_w, ((0, po), (0, 0)))
        sigma_w = jnp.pad(sigma_w, ((0, po), (0, 0)))
        fout_row = jnp.pad(fout_row, ((0, 0), (0, po)))
        b_eff = jnp.pad(b_eff, ((0, 0), (0, po)))

    # Weights cast once in the wrapper so HBM->VMEM traffic is already halved
    # for bf16.  Noise rows / bias stay f32 (cheap VPU work).
    u_w_m = u_w.astype(mxu_dtype)
    sigma_w_m = sigma_w.astype(mxu_dtype)
    b_eff = b_eff.astype(jnp.float32)

    n_b, n_o, n_k = b_pad // tb, o_pad // to, i_pad // tk

    # --- adaptive grid order: keep the heavier operand resident across the
    # inner sweep.  Weights resident <=> out axis slow, batch axis fast.
    weight_bytes = 2 * o_pad * i_pad * w_item
    x_bytes = b_pad * i_pad * x_item
    weights_resident = weight_bytes >= x_bytes

    if weights_resident:
        grid = (n_o, n_b, n_k)                                # (slow, fast, K)
        x_map = lambda j, i, k: (i, k)
        w_map = lambda j, i, k: (j, k)
        fin_map = lambda j, i, k: (0, k)
        ocol_map = lambda j, i, k: (0, j)
        out_map = lambda j, i, k: (i, j)
    else:
        grid = (n_b, n_o, n_k)
        x_map = lambda i, j, k: (i, k)
        w_map = lambda i, j, k: (j, k)
        fin_map = lambda i, j, k: (0, k)
        ocol_map = lambda i, j, k: (0, j)
        out_map = lambda i, j, k: (i, j)
    # TODO(synk): when both parallel extents are 1 (single-tile shapes), split
    # the batch axis explicitly so v7x's second TensorCore is not idle.

    # --- cost estimate reflecting actual traffic under the chosen order.
    x_reads = 1 if (not weights_resident and n_k == 1) else n_o
    w_reads = 1 if (weights_resident and n_k == 1) else n_b
    cost = pl.CostEstimate(
        flops=4 * b_pad * o_pad * i_pad,                      # two matmuls
        transcendentals=0,
        bytes_accessed=int(x_reads * b_pad * i_pad * x_item
                           + w_reads * weight_bytes
                           + b_pad * o_pad * x_item
                           + i_pad * 4 + 2 * o_pad * 4),
    )

    vmem_limit = int(min(64 * 1024 * 1024,
                         max(32 * 1024 * 1024, fp + 8 * 1024 * 1024)))

    kernel = functools.partial(_noisy_linear_kernel, mxu_dtype=mxu_dtype)

    out = pl.pallas_call(
        kernel,
        out_shape=jax.ShapeDtypeStruct((b_pad, o_pad), x.dtype),
        grid_spec=pltpu.PrefetchScalarGridSpec(
            num_scalar_prefetch=0,
            grid=grid,
            in_specs=[
                pl.BlockSpec((tb, tk), x_map),        # x tile
                pl.BlockSpec((to, tk), w_map),        # u_w slab
                pl.BlockSpec((to, tk), w_map),        # sigma_w slab
                pl.BlockSpec((1, to), ocol_map),      # b_eff row
                pl.BlockSpec((1, tk), fin_map),       # f(eps_in) row
                pl.BlockSpec((1, to), ocol_map),      # f(eps_out) row
            ],
            out_specs=pl.BlockSpec((tb, to), out_map),
            scratch_shapes=[pltpu.VMEM((tb, to), jnp.float32)],
        ),
        compiler_params=pltpu.CompilerParams(
            dimension_semantics=("parallel", "parallel", "arbitrary"),
            vmem_limit_bytes=vmem_limit),
        cost_estimate=cost,
    )(x, u_w_m, sigma_w_m, b_eff, rand_in, fout_row)

    return out[:B, :out_features]


def init_params(key, in_features, out_features):
    """Deterministic init matching FactorizedNoisy.reset_parameters()."""
    stdv = 1.0 / math.sqrt(in_features)
    k_w, k_b = jax.random.split(key)
    u_w = jax.random.uniform(k_w, (out_features, in_features), jnp.float32,
                             minval=-stdv, maxval=stdv)
    u_b = jax.random.uniform(k_b, (out_features,), jnp.float32,
                             minval=-stdv, maxval=stdv)
    sigma_w = jnp.full((out_features, in_features), 0.5 * stdv, jnp.float32)
    sigma_b = jnp.full((out_features,), 0.5 * stdv, jnp.float32)
    return u_w, sigma_w, u_b, sigma_b


def reference_forward(x, u_w, sigma_w, u_b, sigma_b, noise_key):
    """Pure-JAX reference (same noise sampling) for correctness checking."""
    def f(v):
        return jnp.sign(v) * jnp.sqrt(jnp.abs(v))
    k_in, k_out = jax.random.split(noise_key)
    rand_in = f(jax.random.normal(k_in, (1, x.shape[1]), jnp.float32))
    rand_out = f(jax.random.normal(k_out, (u_w.shape[0], 1), jnp.float32))
    eps_w = rand_out @ rand_in
    eps_b = rand_out[:, 0]
    w = u_w + sigma_w * eps_w
    b = u_b + sigma_b * eps_b
    return x @ w.T + b


if __name__ == "__main__":
    in_features = 32
    out_features = 16
    batch = 16

    root = jax.random.PRNGKey(0)
    k_param, k_x, k_noise = jax.random.split(root, 3)

    u_w, sigma_w, u_b, sigma_b = init_params(k_param, in_features, out_features)
    x = jax.random.normal(k_x, (batch, in_features), jnp.float32)

    ref = reference_forward(x, u_w, sigma_w, u_b, sigma_b, k_noise)

    # f32 MXU path: bit-tight check against the reference.
    out_f32 = factorized_noisy_forward(x, u_w, sigma_w, u_b, sigma_b, k_noise,
                                       mxu_dtype=jnp.float32)
    out_f32 = jax.block_until_ready(out_f32)
    assert out_f32.shape == (batch, out_features)
    assert jnp.allclose(out_f32, ref, atol=1e-4, rtol=1e-4)

    # Default bf16 MXU path (f32 accumulation): looser tolerance is expected
    # from the bf16 operand cast, not a kernel bug.
    out_bf16 = factorized_noisy_forward(x, u_w, sigma_w, u_b, sigma_b, k_noise)
    out_bf16 = jax.block_until_ready(out_bf16)
    assert out_bf16.shape == (batch, out_features)
    assert jnp.allclose(out_bf16, ref, atol=3e-2, rtol=3e-2)

    print("KERNEL_OK")
</pallas_src>

<mosaic_0001>
module attributes {stable_mosaic.version = 11 : i64} {
  func.func @_noisy_linear_kernel(%arg0: i32, %arg1: i32, %arg2: i32, %arg3: memref<16x32xf32, #tpu.memory_space<vmem>>, %arg4: memref<128x32xf32, #tpu.memory_space<vmem>>, %arg5: memref<128x32xf32, #tpu.memory_space<vmem>>, %arg6: memref<1x128xf32, #tpu.memory_space<vmem>>, %arg7: memref<1x32xf32, #tpu.memory_space<vmem>>, %arg8: memref<1x128xf32, #tpu.memory_space<vmem>>, %arg9: memref<16x128xf32, #tpu.memory_space<vmem>>, %arg10: memref<16x128xf32, #tpu.memory_space<vmem>>) attributes {dimension_semantics = [#tpu.dimension_semantics<parallel>, #tpu.dimension_semantics<parallel>, #tpu.dimension_semantics<arbitrary>], iteration_bounds = array<i64: 1, 1, 1>, scalar_prefetch = 0 : i64, scratch_operands = 1 : i64, tpu.core_type = #tpu.core_type<tc>, window_params = [{transform_indices = @transform_0, window_bounds = array<i64: 16, 32>}, {transform_indices = @transform_1, window_bounds = array<i64: 128, 32>}, {transform_indices = @transform_2, window_bounds = array<i64: 128, 32>}, {transform_indices = @transform_3, window_bounds = array<i64: 1, 128>}, {transform_indices = @transform_4, window_bounds = array<i64: 1, 32>}, {transform_indices = @transform_5, window_bounds = array<i64: 1, 128>}, {transform_indices = @transform_6, window_bounds = array<i64: 16, 128>}]} {
    %c0_i32 = arith.constant 0 : i32
    %0 = arith.cmpi eq, %arg2, %c0_i32 : i32
    %1 = arith.extui %0 : i1 to i32
    %c0_i32_0 = arith.constant 0 : i32
    %2 = arith.cmpi ne, %1, %c0_i32_0 : i32
    scf.if %2 {
      %cst_17 = arith.constant 0.000000e+00 : f32
      %21 = vector.broadcast %cst_17 : f32 to vector<16x128xf32>
      %c0_18 = arith.constant 0 : index
      %c0_19 = arith.constant 0 : index
      %22 = vector.load %arg10[%c0_18, %c0_19] : memref<16x128xf32, #tpu.memory_space<vmem>>, vector<16x128xf32>
      tpu.vector_store %arg10[%c0_18, %c0_19], %21 {strides = array<i32>} : memref<16x128xf32, #tpu.memory_space<vmem>>, vector<16x128xf32>,
    } else {
    }
    %c0 = arith.constant 0 : index
    %c0_1 = arith.constant 0 : index
    %3 = vector.load %arg3[%c0, %c0_1] : memref<16x32xf32, #tpu.memory_space<vmem>>, vector<16x32xf32>
    %c0_2 = arith.constant 0 : index
    %c0_3 = arith.constant 0 : index
    %4 = vector.load %arg7[%c0_2, %c0_3] : memref<1x32xf32, #tpu.memory_space<vmem>>, vector<1x32xf32>
    %c0_4 = arith.constant 0 : index
    %c0_5 = arith.constant 0 : index
    %5 = vector.load %arg8[%c0_4, %c0_5] : memref<1x128xf32, #tpu.memory_space<vmem>>, vector<1x128xf32>
    %6 = vector.broadcast %4 : vector<1x32xf32> to vector<16x32xf32>
    %7 = arith.mulf %3, %6 : vector<16x32xf32>
    %c0_6 = arith.constant 0 : index
    %c0_7 = arith.constant 0 : index
    %8 = vector.load %arg4[%c0_6, %c0_7] : memref<128x32xf32, #tpu.memory_space<vmem>>, vector<128x32xf32>
    %cst = arith.constant dense<0.000000e+00> : vector<16x128xf32>
    %9 = tpu.matmul %3, %8, %cst {dimension_numbers = #tpu.dot_dimension_numbers<[1], [1], [0], [0], [0, 0, 1, 0], [], []>} : vector<16x32xf32>, vector<128x32xf32>, vector<16x128xf32> -> vector<16x128xf32>
    %c0_8 = arith.constant 0 : index
    %c0_9 = arith.constant 0 : index
    %10 = vector.load %arg5[%c0_8, %c0_9] : memref<128x32xf32, #tpu.memory_space<vmem>>, vector<128x32xf32>
    %cst_10 = arith.constant dense<0.000000e+00> : vector<16x128xf32>
    %11 = tpu.matmul %7, %10, %cst_10 {dimension_numbers = #tpu.dot_dimension_numbers<[1], [1], [0], [0], [0, 0, 1, 0], [], []>} : vector<16x32xf32>, vector<128x32xf32>, vector<16x128xf32> -> vector<16x128xf32>
    %c0_11 = arith.constant 0 : index
    %c0_12 = arith.constant 0 : index
    %12 = vector.load %arg10[%c0_11, %c0_12] : memref<16x128xf32, #tpu.memory_space<vmem>>, vector<16x128xf32>
    %13 = vector.broadcast %5 : vector<1x128xf32> to vector<16x128xf32>
    %14 = arith.mulf %11, %13 : vector<16x128xf32>
    %15 = arith.addf %9, %14 : vector<16x128xf32>
    %16 = arith.addf %12, %15 : vector<16x128xf32>
    %c0_13 = arith.constant 0 : index
    %c0_14 = arith.constant 0 : index
    %17 = vector.load %arg10[%c0_13, %c0_14] : memref<16x128xf32, #tpu.memory_space<vmem>>, vector<16x128xf32>
    tpu.vector_store %arg10[%c0_13, %c0_14], %16 {strides = array<i32>} : memref<16x128xf32, #tpu.memory_space<vmem>>, vector<16x128xf32>,
    %c0_i32_15 = arith.constant 0 : i32
    %18 = arith.cmpi eq, %arg2, %c0_i32_15 : i32
    %19 = arith.extui %18 : i1 to i32
    %c0_i32_16 = arith.constant 0 : i32
    %20 = arith.cmpi ne, %19, %c0_i32_16 : i32
    scf.if %20 {
      %c0_17 = arith.constant 0 : index
      %c0_18 = arith.constant 0 : index
      %21 = vector.load %arg10[%c0_17, %c0_18] : memref<16x128xf32, #tpu.memory_space<vmem>>, vector<16x128xf32>
      %c0_19 = arith.constant 0 : index
      %c0_20 = arith.constant 0 : index
      %22 = vector.load %arg6[%c0_19, %c0_20] : memref<1x128xf32, #tpu.memory_space<vmem>>, vector<1x128xf32>
      %23 = vector.broadcast %22 : vector<1x128xf32> to vector<16x128xf32>
      %24 = arith.addf %21, %23 : vector<16x128xf32>
      %c0_21 = arith.constant 0 : index
      %c0_22 = arith.constant 0 : index
      %25 = vector.load %arg9[%c0_21, %c0_22] : memref<16x128xf32, #tpu.memory_space<vmem>>, vector<16x128xf32>
      tpu.vector_store %arg9[%c0_21, %c0_22], %24 {strides = array<i32>} : memref<16x128xf32, #tpu.memory_space<vmem>>, vector<16x128xf32>,
    } else {
    }
    return
  }
  func.func @transform_0(%arg0: i32, %arg1: i32, %arg2: i32) -> (i32, i32) {
    %c0_i32 = arith.constant 0 : i32
    return %arg1, %arg2 : i32, i32
  }
  func.func @transform_1(%arg0: i32, %arg1: i32, %arg2: i32) -> (i32, i32) {
    %c0_i32 = arith.constant 0 : i32
    return %arg0, %arg2 : i32, i32
  }
  func.func @transform_2(%arg0: i32, %arg1: i32, %arg2: i32) -> (i32, i32) {
    %c0_i32 = arith.constant 0 : i32
    return %arg0, %arg2 : i32, i32
  }
  func.func @transform_3(%arg0: i32, %arg1: i32, %arg2: i32) -> (i32, i32) {
    %c0_i32 = arith.constant 0 : i32
    %c0_i32_0 = arith.constant 0 : i32
    return %c0_i32, %arg0 : i32, i32
  }
  func.func @transform_4(%arg0: i32, %arg1: i32, %arg2: i32) -> (i32, i32) {
    %c0_i32 = arith.constant 0 : i32
    %c0_i32_0 = arith.constant 0 : i32
    return %c0_i32, %arg2 : i32, i32
  }
  func.func @transform_5(%arg0: i32, %arg1: i32, %arg2: i32) -> (i32, i32) {
    %c0_i32 = arith.constant 0 : i32
    %c0_i32_0 = arith.constant 0 : i32
    return %c0_i32, %arg0 : i32, i32
  }
  func.func @transform_6(%arg0: i32, %arg1: i32, %arg2: i32) -> (i32, i32) {
    %c0_i32 = arith.constant 0 : i32
    return %arg1, %arg0 : i32, i32
  }
}

</mosaic_0001>

<llo_original>
// kernel: tpu_custom_call.1
$region0: #{tpu_custom_call.1}
  #allocation0 [shape = 'u32[]', space=smem, size = 0x4, offset = 0x4, fixed_abs, tag = 'smem constant byte address 0x4 - core index']
  #allocation1 [shape = 'u32[144,128]{1,0:T(1,128)}', space=vmem, size = 0x12000, scoped, tag = 'internal scratch']
  #allocation2 [shape = 'f32[16,128]{1,0:T(8,128)}', space=vmem, size = 0x2000, scoped, tag = 'scratch operand']
  %s0 = inlined_call_operand.vmem [shape: f32[16,32], index: 0, kind: input, shape index: {}]
  %s1 = inlined_call_operand.vmem [shape: f32[128,32], index: 1, kind: input, shape index: {}]
  %s2 = inlined_call_operand.vmem [shape: f32[128,32], index: 2, kind: input, shape index: {}]
  %s3 = inlined_call_operand.vmem [shape: f32[1,128], index: 3, kind: input, shape index: {}]
  %s4 = inlined_call_operand.vmem [shape: f32[1,32], index: 4, kind: input, shape index: {}]
  %s5 = inlined_call_operand.vmem [shape: f32[1,128], index: 5, kind: input, shape index: {}]
  %s6 = inlined_call_operand.hbm [shape: f32[16,128], index: 6, kind: output, shape index: {}]
  %s7 = sld [smem:[#allocation0]]
  $region42: #{tpu_custom_call.1} parent=0
    _
  %s9 = ssub.s32 1, %s7
  %s10 = scalar_select 0, %s9, %s7
  $region1: #{tpu_custom_call.1} parent=0
    #allocation3 [shape = 'u8[8192]{0}', space=vmem, size = 0x2000, scoped, tag = 'output window, operand 0, single buffered']
    #allocation4 [shape = 's32[1]{0}', space=sflag, size = 0x4, scoped, tag = 'scoped memory for tpu_custom_call.1']
    %11 = vsyncpa [#allocation4], 0
    // Predicated region
    $region2: #{tpu_custom_call.1} parent=1 // pred_check
      _
    $region3: #{tpu_custom_call.1} parent=1 // pred_check_branch
      %13 = sbr.rel (0) target = $region5
    $region4: #{tpu_custom_call.1} parent=1 // pred_region
      _
    $region5: #{tpu_custom_call.1} parent=1 // pred_fallthru
      _
    // Predicated region
    $region6: #{tpu_custom_call.1} parent=1 // pred_check
      _
    $region7: #{tpu_custom_call.1} parent=1 // pred_check_branch
      %15 = sbr.rel (0) target = $region9
    $region8: #{tpu_custom_call.1} parent=1 // pred_region
      _
    $region9: #{tpu_custom_call.1} parent=1 // pred_fallthru
      _
    // Predicated region
    $region10: #{tpu_custom_call.1} parent=1 // pred_check
      _
    $region11: #{tpu_custom_call.1} parent=1 // pred_check_branch
      %17 = sbr.rel (0) target = $region13
    $region12: #{tpu_custom_call.1} parent=1 // pred_region
      _
    $region13: #{tpu_custom_call.1} parent=1 // pred_fallthru
      _
    // Predicated region
    $region14: #{tpu_custom_call.1} parent=1 // pred_check
      _
    $region15: #{tpu_custom_call.1} parent=1 // pred_check_branch
      %19 = sbr.rel (0) target = $region17
    $region16: #{tpu_custom_call.1} parent=1 // pred_region
      _
    $region17: #{tpu_custom_call.1} parent=1 // pred_fallthru
      _
    // Predicated region
    $region18: #{tpu_custom_call.1} parent=1 // pred_check
      _
    $region19: #{tpu_custom_call.1} parent=1 // pred_check_branch
      %21 = sbr.rel (0) target = $region21
    $region20: #{tpu_custom_call.1} parent=1 // pred_region
      _
    $region21: #{tpu_custom_call.1} parent=1 // pred_fallthru
      _
    // Predicated region
    $region22: #{tpu_custom_call.1} parent=1 // pred_check
      _
    $region23: #{tpu_custom_call.1} parent=1 // pred_check_branch
      %23 = sbr.rel (0) target = $region25
    $region24: #{tpu_custom_call.1} parent=1 // pred_region
      _
    $region25: #{tpu_custom_call.1} parent=1 // pred_fallthru
      _
    %p24 = scmp.eq.s32.totalorder 0, 0
    // Predicated region
    $region26: #{tpu_custom_call.1} parent=1 // pred_check
      %p25 = pneg %p24
    $region27: #{tpu_custom_call.1} parent=1 // pred_check_branch
      %27 = sbr.rel (%p25) target = $region29
    $region28: #{tpu_custom_call.1} parent=1 // pred_region
      %28 = vst [vmem:[#allocation2] sm:$0xff] 0.0
      %29 = vst [vmem:[#allocation2 + $0x8] sm:$0xff] 0.0
    $region29: #{tpu_custom_call.1} parent=1 // pred_fallthru
      _
    %v30 = vld [vmem:[%s0] sm:$0xff]
    %v31 = vld [vmem:[%s0 + $0x8] sm:$0xff]
    %v32 = vld [vmem:[%s4] sm:$0x1]
    %v33 = vld [vmem:[%s5] sm:$0x1]
    %v35 = vlaneseq
    %v36 = vshrl.u32 %v35, 7
    %v37 = vsub.s32 0, %v36
    %v38 = vrot.slane %v32, %v37
    %v40 = vmul.f32 %v30, %v38
    %v41 = vmul.f32 %v31, %v38
    %v42 = vld [vmem:[%s1] sm:$0xff]
    %v43 = vld [vmem:[%s1 + $0x8] sm:$0xff]
    %v44 = vld [vmem:[%s1 + $0x10] sm:$0xff]
    %v45 = vld [vmem:[%s1 + $0x18] sm:$0xff]
    %v46 = vld [vmem:[%s1 + $0x20] sm:$0xff]
    %v47 = vld [vmem:[%s1 + $0x28] sm:$0xff]
    %v48 = vld [vmem:[%s1 + $0x30] sm:$0xff]
    %v49 = vld [vmem:[%s1 + $0x38] sm:$0xff]
    %v50 = vld [vmem:[%s1 + $0x40] sm:$0xff]
    %v51 = vld [vmem:[%s1 + $0x48] sm:$0xff]
    %v52 = vld [vmem:[%s1 + $0x50] sm:$0xff]
    %v53 = vld [vmem:[%s1 + $0x58] sm:$0xff]
    %v54 = vld [vmem:[%s1 + $0x60] sm:$0xff]
    %v55 = vld [vmem:[%s1 + $0x68] sm:$0xff]
    %v56 = vld [vmem:[%s1 + $0x70] sm:$0xff]
    %v57 = vld [vmem:[%s1 + $0x78] sm:$0xff]
    %v58 = vld [vmem:[%s2] sm:$0xff]
    %v59 = vld [vmem:[%s2 + $0x8] sm:$0xff]
    %v60 = vld [vmem:[%s2 + $0x10] sm:$0xff]
    %v61 = vld [vmem:[%s2 + $0x18] sm:$0xff]
    %v62 = vld [vmem:[%s2 + $0x20] sm:$0xff]
    %v63 = vld [vmem:[%s2 + $0x28] sm:$0xff]
    %v64 = vld [vmem:[%s2 + $0x30] sm:$0xff]
    %v65 = vld [vmem:[%s2 + $0x38] sm:$0xff]
    %v66 = vld [vmem:[%s2 + $0x40] sm:$0xff]
    %v67 = vld [vmem:[%s2 + $0x48] sm:$0xff]
    %v68 = vld [vmem:[%s2 + $0x50] sm:$0xff]
    %v69 = vld [vmem:[%s2 + $0x58] sm:$0xff]
    %v70 = vld [vmem:[%s2 + $0x60] sm:$0xff]
    %v71 = vld [vmem:[%s2 + $0x68] sm:$0xff]
    %v72 = vld [vmem:[%s2 + $0x70] sm:$0xff]
    %v73 = vld [vmem:[%s2 + $0x78] sm:$0xff]
    %vm74 = vcmask 261120
    %v76 = vsel %vm74, %v40, 0
    %v79 = vsel %vm74, %v41, 0
    %v82 = vsel %vm74, %v58, 0
    %v85 = vsel %vm74, %v59, 0
    %v88 = vsel %vm74, %v60, 0
    %v91 = vsel %vm74, %v61, 0
    %v94 = vsel %vm74, %v62, 0
    %v97 = vsel %vm74, %v63, 0
    %v100 = vsel %vm74, %v64, 0
    %v103 = vsel %vm74, %v65, 0
    %v106 = vsel %vm74, %v66, 0
    %v109 = vsel %vm74, %v67, 0
    %v112 = vsel %vm74, %v68, 0
    %v115 = vsel %vm74, %v69, 0
    %v118 = vsel %vm74, %v70, 0
    %v121 = vsel %vm74, %v71, 0
    %v124 = vsel %vm74, %v72, 0
    %v127 = vsel %vm74, %v73, 0
    %129 = vmatprep.subr.mxu0 0.0
    %130 = vmatpush1.xpose.msra.mxu0 %v82
    %131 = vmatprep.subr.mxu0 0.0
    %132 = vmatpush1.xpose.msra.mxu0 %v85
    %133 = vmatprep.subr.mxu0 0.0
    %134 = vmatpush1.xpose.msra.mxu0 %v88
    %135 = vmatprep.subr.mxu0 0.0
    %136 = vmatpush1.xpose.msra.mxu0 %v91
    %137 = vmatprep.subr.mxu0 0.0
    %138 = vmatpush1.xpose.msra.mxu0 %v94
    %139 = vmatprep.subr.mxu0 0.0
    %140 = vmatpush1.xpose.msra.mxu0 %v97
    %141 = vmatprep.subr.mxu0 0.0
    %142 = vmatpush1.xpose.msra.mxu0 %v100
    %143 = vmatprep.subr.mxu0 0.0
    %144 = vmatpush1.xpose.msra.mxu0 %v103
    %145 = vmatprep.subr.mxu0 0.0
    %146 = vmatpush1.xpose.msra.mxu0 %v106
    %147 = vmatprep.subr.mxu0 0.0
    %148 = vmatpush1.xpose.msra.mxu0 %v109
    %149 = vmatprep.subr.mxu0 0.0
    %150 = vmatpush1.xpose.msra.mxu0 %v112
    %151 = vmatprep.subr.mxu0 0.0
    %152 = vmatpush1.xpose.msra.mxu0 %v115
    %153 = vmatprep.subr.mxu0 0.0
    %154 = vmatpush1.xpose.msra.mxu0 %v118
    %155 = vmatprep.subr.mxu0 0.0
    %156 = vmatpush1.xpose.msra.mxu0 %v121
    %157 = vmatprep.subr.mxu0 0.0
    %158 = vmatpush1.xpose.msra.mxu0 %v124
    %159 = vmatprep.subr.mxu0 0.0
    %160 = vmatpush1.xpose.msra.mxu0 %v127
    %161 = vmatprep.subr.mxu0 0.0
    %162 = vmatpush1.xpose.msra.mxu0 0.0
    %163 = vmatprep.subr.mxu0 0.0
    %164 = vmatpush1.xpose.msra.mxu0 0.0
    %165 = vmatprep.subr.mxu0 0.0
    %166 = vmatpush1.xpose.msra.mxu0 0.0
    %167 = vmatprep.subr.mxu0 0.0
    %168 = vmatpush1.xpose.msra.mxu0 0.0
    %169 = vmatprep.subr.mxu0 0.0
    %170 = vmatpush1.xpose.msra.mxu0 0.0
    %171 = vmatprep.subr.mxu0 0.0
    %172 = vmatpush1.xpose.msra.mxu0 0.0
    %173 = vmatprep.subr.mxu0 0.0
    %174 = vmatpush1.xpose.msra.mxu0 0.0
    %175 = vmatprep.subr.mxu0 0.0
    %176 = vmatpush1.xpose.msra.mxu0 0.0
    %177 = vmatprep.subr.mxu0 0.0
    %178 = vmatpush1.xpose.msra.mxu0 0.0
    %179 = vmatprep.subr.mxu0 0.0
    %180 = vmatpush1.xpose.msra.mxu0 0.0
    %181 = vmatprep.subr.mxu0 0.0
    %182 = vmatpush1.xpose.msra.mxu0 0.0
    %183 = vmatprep.subr.mxu0 0.0
    %184 = vmatpush1.xpose.msra.mxu0 0.0
    %185 = vmatprep.subr.mxu0 0.0
    %186 = vmatpush1.xpose.msra.mxu0 0.0
    %187 = vmatprep.subr.mxu0 0.0
    %188 = vmatpush1.xpose.msra.mxu0 0.0
    %189 = vmatprep.subr.mxu0 0.0
    %190 = vmatpush1.xpose.msra.mxu0 0.0
    %191 = vmatprep.subr.mxu0 0.0
    %192 = vmatpush1.xpose.msra.mxu0 0.0
    %193 = vmatprep.mubr.f32.mxu0 0.0
    %194 = vmatmul.mubr.f32.gmra.mrb[0].mxu0 %v76
    %v195 = vpop.f32.mrb[0].mxu0
    %v196 = vadd.f32 0.0, %v195
    %v197 = vpop.f32.mrb[0].mxu0
    %198 = vmatprep.mubr.f32.mxu0 0.0
    %199 = vmatmul.mubr.f32.gmra.mrb[0].mxu0 %v79
    %v200 = vpop.f32.mrb[0].mxu0
    %v201 = vadd.f32 0.0, %v200
    %v202 = vpop.f32.mrb[0].mxu0
    %203 = vdwg.mxu0
    %v204 = vld [vmem:[#allocation2] sm:$0xff]
    %v205 = vld [vmem:[#allocation2 + $0x8] sm:$0xff]
    %v207 = vlaneseq
    %v208 = vshrl.u32 %v207, 7
    %v209 = vsub.s32 0, %v208
    %v210 = vrot.slane %v33, %v209
    %v212 = vmul.f32 %v196, %v210
    %v213 = vmul.f32 %v201, %v210
    %v215 = vsel %vm74, %v30, 0
    %v218 = vsel %vm74, %v31, 0
    %v221 = vsel %vm74, %v42, 0
    %v224 = vsel %vm74, %v43, 0
    %v227 = vsel %vm74, %v44, 0
    %v230 = vsel %vm74, %v45, 0
    %v233 = vsel %vm74, %v46, 0
    %v236 = vsel %vm74, %v47, 0
    %v239 = vsel %vm74, %v48, 0
    %v242 = vsel %vm74, %v49, 0
    %v245 = vsel %vm74, %v50, 0
    %v248 = vsel %vm74, %v51, 0
    %v251 = vsel %vm74, %v52, 0
    %v254 = vsel %vm74, %v53, 0
    %v257 = vsel %vm74, %v54, 0
    %v260 = vsel %vm74, %v55, 0
    %v263 = vsel %vm74, %v56, 0
    %v266 = vsel %vm74, %v57, 0
    %268 = vmatprep.subr.mxu0 0.0
    %269 = vmatpush1.xpose.msra.mxu0 %v221
    %270 = vmatprep.subr.mxu0 0.0
    %271 = vmatpush1.xpose.msra.mxu0 %v224
    %272 = vmatprep.subr.mxu0 0.0
    %273 = vmatpush1.xpose.msra.mxu0 %v227
    %274 = vmatprep.subr.mxu0 0.0
    %275 = vmatpush1.xpose.msra.mxu0 %v230
    %276 = vmatprep.subr.mxu0 0.0
    %277 = vmatpush1.xpose.msra.mxu0 %v233
    %278 = vmatprep.subr.mxu0 0.0
    %279 = vmatpush1.xpose.msra.mxu0 %v236
    %280 = vmatprep.subr.mxu0 0.0
    %281 = vmatpush1.xpose.msra.mxu0 %v239
    %282 = vmatprep.subr.mxu0 0.0
    %283 = vmatpush1.xpose.msra.mxu0 %v242
    %284 = vmatprep.subr.mxu0 0.0
    %285 = vmatpush1.xpose.msra.mxu0 %v245
    %286 = vmatprep.subr.mxu0 0.0
    %287 = vmatpush1.xpose.msra.mxu0 %v248
    %288 = vmatprep.subr.mxu0 0.0
    %289 = vmatpush1.xpose.msra.mxu0 %v251
    %290 = vmatprep.subr.mxu0 0.0
    %291 = vmatpush1.xpose.msra.mxu0 %v254
    %292 = vmatprep.subr.mxu0 0.0
    %293 = vmatpush1.xpose.msra.mxu0 %v257
    %294 = vmatprep.subr.mxu0 0.0
    %295 = vmatpush1.xpose.msra.mxu0 %v260
    %296 = vmatprep.subr.mxu0 0.0
    %297 = vmatpush1.xpose.msra.mxu0 %v263
    %298 = vmatprep.subr.mxu0 0.0
    %299 = vmatpush1.xpose.msra.mxu0 %v266
    %300 = vmatprep.subr.mxu0 0.0
    %301 = vmatpush1.xpose.msra.mxu0 0.0
    %302 = vmatprep.subr.mxu0 0.0
    %303 = vmatpush1.xpose.msra.mxu0 0.0
    %304 = vmatprep.subr.mxu0 0.0
    %305 = vmatpush1.xpose.msra.mxu0 0.0
    %306 = vmatprep.subr.mxu0 0.0
    %307 = vmatpush1.xpose.msra.mxu0 0.0
    %308 = vmatprep.subr.mxu0 0.0
    %309 = vmatpush1.xpose.msra.mxu0 0.0
    %310 = vmatprep.subr.mxu0 0.0
    %311 = vmatpush1.xpose.msra.mxu0 0.0
    %312 = vmatprep.subr.mxu0 0.0
    %313 = vmatpush1.xpose.msra.mxu0 0.0
    %314 = vmatprep.subr.mxu0 0.0
    %315 = vmatpush1.xpose.msra.mxu0 0.0
    %316 = vmatprep.subr.mxu0 0.0
    %317 = vmatpush1.xpose.msra.mxu0 0.0
    %318 = vmatprep.subr.mxu0 0.0
    %319 = vmatpush1.xpose.msra.mxu0 0.0
    %320 = vmatprep.subr.mxu0 0.0
    %321 = vmatpush1.xpose.msra.mxu0 0.0
    %322 = vmatprep.subr.mxu0 0.0
    %323 = vmatpush1.xpose.msra.mxu0 0.0
    %324 = vmatprep.subr.mxu0 0.0
    %325 = vmatpush1.xpose.msra.mxu0 0.0
    %326 = vmatprep.subr.mxu0 0.0
    %327 = vmatpush1.xpose.msra.mxu0 0.0
    %328 = vmatprep.subr.mxu0 0.0
    %329 = vmatpush1.xpose.msra.mxu0 0.0
    %330 = vmatprep.subr.mxu0 0.0
    %331 = vmatpush1.xpose.msra.mxu0 0.0
    %332 = vmatprep.mubr.f32.mxu0 0.0
    %333 = vmatmul.mubr.f32.gmra.mrb[0].mxu0 %v215
    %v334 = vpop.f32.mrb[0].mxu0
    %v335 = vadd.f32 %v212, %v334
    %v336 = vpop.f32.mrb[0].mxu0
    %337 = vmatprep.mubr.f32.mxu0 0.0
    %338 = vmatmul.mubr.f32.gmra.mrb[0].mxu0 %v218
    %v339 = vpop.f32.mrb[0].mxu0
    %v340 = vadd.f32 %v213, %v339
    %v341 = vpop.f32.mrb[0].mxu0
    %342 = vdwg.mxu0
    %v343 = vadd.f32 %v204, %v335
    %v344 = vadd.f32 %v205, %v340
    %345 = vst [vmem:[#allocation2] sm:$0xff] %v343
    %346 = vst [vmem:[#allocation2 + $0x8] sm:$0xff] %v344
    // Predicated region
    $region30: #{tpu_custom_call.1} parent=1 // pred_check
      %p347 = pneg %p24
    $region31: #{tpu_custom_call.1} parent=1 // pred_check_branch
      %349 = sbr.rel (%p347) target = $region33
    $region32: #{tpu_custom_call.1} parent=1 // pred_region
      %v350 = vld [vmem:[#allocation2] sm:$0xff]
      %v351 = vld [vmem:[#allocation2 + $0x8] sm:$0xff]
      %v352 = vld [vmem:[%s3] sm:$0x1]
      %v354 = vlaneseq
      %v355 = vshrl.u32 %v354, 7
      %v356 = vsub.s32 0, %v355
      %v357 = vrot.slane %v352, %v356
      %v359 = vadd.f32 %v350, %v357
      %v360 = vadd.f32 %v351, %v357
      %361 = vst [vmem:[#allocation3] sm:$0xff] %v359
      %362 = vst [vmem:[#allocation3 + $0x8] sm:$0xff] %v360
    $region33: #{tpu_custom_call.1} parent=1 // pred_fallthru
      _
    // Predicated region
    $region34: #{tpu_custom_call.1} parent=1 // pred_check
      _
    $region35: #{tpu_custom_call.1} parent=1 // pred_check_branch
      %364 = sbr.rel (0) target = $region37
    $region36: #{tpu_custom_call.1} parent=1 // pred_region
      %s366 = ssub.s32 256, 256
      %367 = vsyncadd [#allocation4], %s366
      %s368 = sshll.u32 [#allocation3], 4
      %s369 = int_to_ptr.vmem [resolvable:$true] %s368
      %374 = dma.vmem_to_hbm [thread:$0]  %s369, 256, %s6, [#allocation4], 128, 128, 8
    $region37: #{tpu_custom_call.1} parent=1 // pred_fallthru
      _
    // Predicated region
    $region38: #{tpu_custom_call.1} parent=1 // pred_check
      _
    $region39: #{tpu_custom_call.1} parent=1 // pred_check_branch
      %376 = sbr.rel (0) target = $region41
    $region40: #{tpu_custom_call.1} parent=1 // pred_region
      %377 = dma.done [#allocation4], 256
    $region41: #{tpu_custom_call.1} parent=1 // pred_fallthru
      _
    %378 = vsyncpa [#allocation4], 1

</llo_original>
